<compile_context>
chip_gen: v7x
topology: tpu7x:2x2x1
jax: 0.10.0
libtpu: 0.0.40
codegen_flags: <defaults>
</compile_context>

<pallas_src>
import functools

import jax
import jax.numpy as jnp
from jax.experimental import pallas as pl
from jax.experimental.pallas import tpu as pltpu


def _round_up(n, m):
    return ((n + m - 1) // m) * m


def _hash_random_bits(seed_u32, base_u32, salt, shape, n_cols):
    """Counter-based uint32 hash (murmur3-style finalizer) over a (rows, cols) tile."""
    r = jax.lax.broadcasted_iota(jnp.int32, shape, 0).astype(jnp.uint32)
    c = jax.lax.broadcasted_iota(jnp.int32, shape, 1).astype(jnp.uint32)
    x = base_u32 + r * jnp.uint32(n_cols) + c          # global element counter
    x = x + seed_u32 * jnp.uint32(0x9E3779B9) + jnp.uint32(salt)
    x = x ^ (x >> jnp.uint32(16))
    x = x * jnp.uint32(0x7FEB352D)
    x = x ^ (x >> jnp.uint32(15))
    x = x * jnp.uint32(0x846CA68B)
    x = x ^ (x >> jnp.uint32(16))
    return x


def _dropout(h, seed_u32, base_u32, *, salt, p):
    """Inverted dropout via an integer-threshold keep test (single int32 compare)."""
    bits = _hash_random_bits(seed_u32, base_u32, salt, h.shape, h.shape[-1])
    bits31 = (bits >> jnp.uint32(1)).astype(jnp.int32)            # uniform in [0, 2^31)
    thresh = jnp.int32(min(int(p * float(1 << 31)), (1 << 31) - 1))
    keep = bits31 >= thresh                                       # P(keep) = 1 - p
    return jnp.where(keep, h * (1.0 / (1.0 - p)), 0.0)


def prenet_kernel(seed_ref, x_ref, w1_ref, b1_ref, w2_ref, b2_ref, o_ref,
                  *, block_rows, out_features, dropout_p, train):
    """Fused fc1 -> relu -> dropout -> fc2 -> relu -> dropout on one row tile."""
    use_dropout = train and dropout_p > 0.0
    if use_dropout:
        seed_u32 = seed_ref[0].astype(jnp.uint32)
        row0 = pl.program_id(0) * block_rows
        base_u32 = (row0 * out_features).astype(jnp.uint32)

    # fc1 + ReLU  (bf16 MXU matmul, f32 accumulate)
    x = x_ref[...].astype(jnp.bfloat16)
    h = jnp.dot(x, w1_ref[...], preferred_element_type=jnp.float32)
    h = jnp.maximum(h + b1_ref[...].astype(jnp.float32), 0.0)
    if use_dropout:
        h = _dropout(h, seed_u32, base_u32, salt=0x243F6A88, p=dropout_p)

    # fc2 + ReLU
    h2 = jnp.dot(h.astype(jnp.bfloat16), w2_ref[...], preferred_element_type=jnp.float32)
    h2 = jnp.maximum(h2 + b2_ref[...].astype(jnp.float32), 0.0)
    if use_dropout:
        h2 = _dropout(h2, seed_u32, base_u32, salt=0x452821E6, p=dropout_p)

    o_ref[...] = h2.astype(o_ref.dtype)


def prenet_forward(x, params, *, seed=0, train=True, dropout_p=0.5, block_rows=1024):
    """x: (..., in_features) -> (..., out_features)."""
    w1, b1, w2, b2 = params
    in_features, out_features = w1.shape
    assert w2.shape == (out_features, out_features)
    assert x.shape[-1] == in_features

    lead_shape = x.shape[:-1]
    rows = 1
    for d in lead_shape:
        rows *= d
    x2d = x.reshape(rows, in_features)

    # bf16 weights feed the MXU and halve weight traffic; biases stay f32 (tiny).
    w1 = w1.astype(jnp.bfloat16)
    w2 = w2.astype(jnp.bfloat16)
    b1 = b1.reshape(1, out_features).astype(jnp.float32)
    b2 = b2.reshape(1, out_features).astype(jnp.float32)

    # Zero-pad the contraction dim to a lane-dense multiple of 128 (no-op on the math).
    k_pad = _round_up(in_features, 128)
    if k_pad != in_features:
        x2d = jnp.pad(x2d, ((0, 0), (0, k_pad - in_features)))
        w1 = jnp.pad(w1, ((0, k_pad - in_features), (0, 0)))

    # Row tiling: cap the tile for small inputs, pad rows to a tile multiple.
    tm = min(block_rows, _round_up(rows, 8))
    rows_p = _round_up(rows, tm)
    if rows_p != rows:
        x2d = jnp.pad(x2d, ((0, rows_p - rows), (0, 0)))
    grid = (rows_p // tm,)

    kernel = functools.partial(
        prenet_kernel, block_rows=tm, out_features=out_features,
        dropout_p=float(dropout_p), train=bool(train))

    flops = 2 * rows_p * (k_pad * out_features + out_features * out_features)
    bytes_accessed = int(
        x2d.size * x2d.dtype.itemsize
        + rows_p * out_features * x.dtype.itemsize
        + w1.size * 2 + w2.size * 2 + (b1.size + b2.size) * 4)

    out2d = pl.pallas_call(
        kernel,
        out_shape=jax.ShapeDtypeStruct((rows_p, out_features), x.dtype),
        grid_spec=pltpu.PrefetchScalarGridSpec(
            num_scalar_prefetch=1,
            grid=grid,
            in_specs=[
                pl.BlockSpec((tm, k_pad), lambda i, s: (i, 0)),                   # x tile
                pl.BlockSpec((k_pad, out_features), lambda i, s: (0, 0)),         # w1 (resident)
                pl.BlockSpec((1, out_features), lambda i, s: (0, 0)),             # b1
                pl.BlockSpec((out_features, out_features), lambda i, s: (0, 0)),  # w2 (resident)
                pl.BlockSpec((1, out_features), lambda i, s: (0, 0)),             # b2
            ],
            out_specs=pl.BlockSpec((tm, out_features), lambda i, s: (i, 0)),
        ),
        compiler_params=pltpu.CompilerParams(
            dimension_semantics=("parallel",)),
        cost_estimate=pl.CostEstimate(
            flops=flops, transcendentals=0, bytes_accessed=bytes_accessed),
    )(jnp.asarray([seed], jnp.int32), x2d, w1, b1, w2, b2)

    out = out2d[:rows]
    return out.reshape(*lead_shape, out_features)


def init_prenet_params(key, in_features=80, out_features=256, dtype=jnp.float32):
    """Matches torch.nn.Linear default init: U(-1/sqrt(fan_in), 1/sqrt(fan_in))."""
    k1, k2, k3, k4 = jax.random.split(key, 4)
    bound1 = 1.0 / (in_features ** 0.5)
    bound2 = 1.0 / (out_features ** 0.5)
    # Stored transposed relative to PyTorch ((in, out)) so the kernel does x @ W.
    w1 = jax.random.uniform(k1, (in_features, out_features), dtype, -bound1, bound1)
    b1 = jax.random.uniform(k2, (out_features,), dtype, -bound1, bound1)
    w2 = jax.random.uniform(k3, (out_features, out_features), dtype, -bound2, bound2)
    b2 = jax.random.uniform(k4, (out_features,), dtype, -bound2, bound2)
    return (w1, b1, w2, b2)


if __name__ == "__main__":
    key = jax.random.PRNGKey(0)
    pkey, xkey = jax.random.split(key)

    in_features, out_features = 80, 256
    batch, seq = 2, 8

    params = init_prenet_params(pkey, in_features, out_features)
    x = jax.random.normal(xkey, (batch, seq, in_features), jnp.float32)

    # Training-mode forward (dropout active, deterministic hash PRNG).
    y_train = jax.block_until_ready(
        prenet_forward(x, params, seed=1234, train=True, dropout_p=0.5))

    # Eval-mode forward (dropout = identity), checked against a pure-JAX reference
    # that uses the same bf16-weight / f32-accumulate arithmetic as the kernel.
    y_eval = jax.block_until_ready(prenet_forward(x, params, train=False))

    w1, b1, w2, b2 = params
    x2 = x.reshape(-1, in_features)
    h_ref = jnp.maximum(
        jnp.dot(x2.astype(jnp.bfloat16), w1.astype(jnp.bfloat16),
                preferred_element_type=jnp.float32) + b1, 0.0)
    y_ref = jnp.maximum(
        jnp.dot(h_ref.astype(jnp.bfloat16), w2.astype(jnp.bfloat16),
                preferred_element_type=jnp.float32) + b2, 0.0)
    y_ref = y_ref.reshape(batch, seq, out_features)

    assert y_train.shape == (batch, seq, out_features)
    assert bool(jnp.all(y_train >= 0.0))        # ReLU + dropout zeros only
    assert bool(jnp.any(y_train == 0.0))        # some elements were dropped/ReLU'd
    assert jnp.allclose(y_eval, y_ref, atol=2e-2, rtol=2e-2)

    print("KERNEL_OK")
</pallas_src>

<mosaic_0001>
module attributes {stable_mosaic.version = 11 : i64} {
  func.func @prenet_kernel(%arg0: i32, %arg1: memref<1xi32, #tpu.memory_space<smem>>, %arg2: memref<16x128xf32, #tpu.memory_space<vmem>>, %arg3: memref<128x256xbf16, #tpu.memory_space<vmem>>, %arg4: memref<1x256xf32, #tpu.memory_space<vmem>>, %arg5: memref<256x256xbf16, #tpu.memory_space<vmem>>, %arg6: memref<1x256xf32, #tpu.memory_space<vmem>>, %arg7: memref<16x256xf32, #tpu.memory_space<vmem>>) attributes {dimension_semantics = [#tpu.dimension_semantics<parallel>], iteration_bounds = array<i64: 1>, scalar_prefetch = 1 : i64, scratch_operands = 0 : i64, tpu.core_type = #tpu.core_type<tc>, window_params = [{transform_indices = @transform_0, window_bounds = array<i64: 16, 128>}, {pipeline_mode = #tpu.pipeline_mode<synchronous>, transform_indices = @transform_1, window_bounds = array<i64: 128, 256>}, {pipeline_mode = #tpu.pipeline_mode<synchronous>, transform_indices = @transform_2, window_bounds = array<i64: 1, 256>}, {pipeline_mode = #tpu.pipeline_mode<synchronous>, transform_indices = @transform_3, window_bounds = array<i64: 256, 256>}, {pipeline_mode = #tpu.pipeline_mode<synchronous>, transform_indices = @transform_4, window_bounds = array<i64: 1, 256>}, {transform_indices = @transform_5, window_bounds = array<i64: 16, 256>}]} {
    %c0 = arith.constant 0 : index
    %0 = memref.load %arg1[%c0] : memref<1xi32, #tpu.memory_space<smem>>
    %c16_i32 = arith.constant 16 : i32
    %1 = arith.muli %arg0, %c16_i32 : i32
    %c256_i32 = arith.constant 256 : i32
    %2 = arith.muli %1, %c256_i32 : i32
    %c0_0 = arith.constant 0 : index
    %c0_1 = arith.constant 0 : index
    %3 = vector.load %arg2[%c0_0, %c0_1] : memref<16x128xf32, #tpu.memory_space<vmem>>, vector<16x128xf32>
    %4 = arith.truncf %3 : vector<16x128xf32> to vector<16x128xbf16>
    %c0_2 = arith.constant 0 : index
    %c0_3 = arith.constant 0 : index
    %5 = vector.load %arg3[%c0_2, %c0_3] : memref<128x256xbf16, #tpu.memory_space<vmem>>, vector<128x256xbf16>
    %cst = arith.constant dense<0.000000e+00> : vector<16x256xf32>
    %6 = tpu.matmul %4, %5, %cst {dimension_numbers = #tpu.dot_dimension_numbers<[1], [0], [0], [1], [0, 0, 1, 1], [], []>} : vector<16x128xbf16>, vector<128x256xbf16>, vector<16x256xf32> -> vector<16x256xf32>
    %c0_4 = arith.constant 0 : index
    %c0_5 = arith.constant 0 : index
    %7 = vector.load %arg4[%c0_4, %c0_5] : memref<1x256xf32, #tpu.memory_space<vmem>>, vector<1x256xf32>
    %8 = vector.broadcast %7 : vector<1x256xf32> to vector<16x256xf32>
    %9 = arith.addf %6, %8 : vector<16x256xf32>
    %cst_6 = arith.constant 0.000000e+00 : f32
    %10 = vector.broadcast %cst_6 : f32 to vector<16x256xf32>
    %11 = arith.maximumf %9, %10 : vector<16x256xf32>
    %12 = tpu.iota {dimensions = array<i32: 0>} : vector<16x256xi32>
    %13 = tpu.iota {dimensions = array<i32: 1>} : vector<16x256xi32>
    %c256_i32_7 = arith.constant 256 : i32
    %14 = vector.broadcast %c256_i32_7 : i32 to vector<16x256xi32>
    %15 = arith.muli %12, %14 : vector<16x256xi32>
    %16 = vector.broadcast %2 : i32 to vector<16x256xi32>
    %17 = arith.addi %16, %15 : vector<16x256xi32>
    %18 = arith.addi %17, %13 : vector<16x256xi32>
    %c-1640531527_i32 = arith.constant -1640531527 : i32
    %19 = arith.muli %0, %c-1640531527_i32 : i32
    %20 = vector.broadcast %19 : i32 to vector<16x256xi32>
    %21 = arith.addi %18, %20 : vector<16x256xi32>
    %c608135816_i32 = arith.constant 608135816 : i32
    %22 = vector.broadcast %c608135816_i32 : i32 to vector<16x256xi32>
    %23 = arith.addi %21, %22 : vector<16x256xi32>
    %c16_i32_8 = arith.constant 16 : i32
    %24 = vector.broadcast %c16_i32_8 : i32 to vector<16x256xi32>
    %25 = arith.shrui %23, %24 : vector<16x256xi32>
    %26 = arith.xori %23, %25 : vector<16x256xi32>
    %c2146121005_i32 = arith.constant 2146121005 : i32
    %27 = vector.broadcast %c2146121005_i32 : i32 to vector<16x256xi32>
    %28 = arith.muli %26, %27 : vector<16x256xi32>
    %c15_i32 = arith.constant 15 : i32
    %29 = vector.broadcast %c15_i32 : i32 to vector<16x256xi32>
    %30 = arith.shrui %28, %29 : vector<16x256xi32>
    %31 = arith.xori %28, %30 : vector<16x256xi32>
    %c-2073254261_i32 = arith.constant -2073254261 : i32
    %32 = vector.broadcast %c-2073254261_i32 : i32 to vector<16x256xi32>
    %33 = arith.muli %31, %32 : vector<16x256xi32>
    %c16_i32_9 = arith.constant 16 : i32
    %34 = vector.broadcast %c16_i32_9 : i32 to vector<16x256xi32>
    %35 = arith.shrui %33, %34 : vector<16x256xi32>
    %36 = arith.xori %33, %35 : vector<16x256xi32>
    %c1_i32 = arith.constant 1 : i32
    %37 = vector.broadcast %c1_i32 : i32 to vector<16x256xi32>
    %38 = arith.shrui %36, %37 : vector<16x256xi32>
    %c1073741824_i32 = arith.constant 1073741824 : i32
    %39 = vector.broadcast %c1073741824_i32 : i32 to vector<16x256xi32>
    %40 = arith.cmpi sge, %38, %39 : vector<16x256xi32>
    %cst_10 = arith.constant 2.000000e+00 : f32
    %41 = vector.broadcast %cst_10 : f32 to vector<16x256xf32>
    %42 = arith.mulf %11, %41 : vector<16x256xf32>
    %cst_11 = arith.constant 0.000000e+00 : f32
    %43 = vector.broadcast %cst_11 : f32 to vector<16x256xf32>
    %44 = arith.select %40, %42, %43 : vector<16x256xi1>, vector<16x256xf32>
    %45 = arith.truncf %44 : vector<16x256xf32> to vector<16x256xbf16>
    %c0_12 = arith.constant 0 : index
    %c0_13 = arith.constant 0 : index
    %46 = vector.load %arg5[%c0_12, %c0_13] : memref<256x256xbf16, #tpu.memory_space<vmem>>, vector<256x256xbf16>
    %cst_14 = arith.constant dense<0.000000e+00> : vector<16x256xf32>
    %47 = tpu.matmul %45, %46, %cst_14 {dimension_numbers = #tpu.dot_dimension_numbers<[1], [0], [0], [1], [0, 0, 1, 1], [], []>} : vector<16x256xbf16>, vector<256x256xbf16>, vector<16x256xf32> -> vector<16x256xf32>
    %c0_15 = arith.constant 0 : index
    %c0_16 = arith.constant 0 : index
    %48 = vector.load %arg6[%c0_15, %c0_16] : memref<1x256xf32, #tpu.memory_space<vmem>>, vector<1x256xf32>
    %49 = vector.broadcast %48 : vector<1x256xf32> to vector<16x256xf32>
    %50 = arith.addf %47, %49 : vector<16x256xf32>
    %cst_17 = arith.constant 0.000000e+00 : f32
    %51 = vector.broadcast %cst_17 : f32 to vector<16x256xf32>
    %52 = arith.maximumf %50, %51 : vector<16x256xf32>
    %53 = tpu.iota {dimensions = array<i32: 0>} : vector<16x256xi32>
    %54 = tpu.iota {dimensions = array<i32: 1>} : vector<16x256xi32>
    %c256_i32_18 = arith.constant 256 : i32
    %55 = vector.broadcast %c256_i32_18 : i32 to vector<16x256xi32>
    %56 = arith.muli %53, %55 : vector<16x256xi32>
    %57 = vector.broadcast %2 : i32 to vector<16x256xi32>
    %58 = arith.addi %57, %56 : vector<16x256xi32>
    %59 = arith.addi %58, %54 : vector<16x256xi32>
    %c-1640531527_i32_19 = arith.constant -1640531527 : i32
    %60 = arith.muli %0, %c-1640531527_i32_19 : i32
    %61 = vector.broadcast %60 : i32 to vector<16x256xi32>
    %62 = arith.addi %59, %61 : vector<16x256xi32>
    %c1160258022_i32 = arith.constant 1160258022 : i32
    %63 = vector.broadcast %c1160258022_i32 : i32 to vector<16x256xi32>
    %64 = arith.addi %62, %63 : vector<16x256xi32>
    %c16_i32_20 = arith.constant 16 : i32
    %65 = vector.broadcast %c16_i32_20 : i32 to vector<16x256xi32>
    %66 = arith.shrui %64, %65 : vector<16x256xi32>
    %67 = arith.xori %64, %66 : vector<16x256xi32>
    %c2146121005_i32_21 = arith.constant 2146121005 : i32
    %68 = vector.broadcast %c2146121005_i32_21 : i32 to vector<16x256xi32>
    %69 = arith.muli %67, %68 : vector<16x256xi32>
    %c15_i32_22 = arith.constant 15 : i32
    %70 = vector.broadcast %c15_i32_22 : i32 to vector<16x256xi32>
    %71 = arith.shrui %69, %70 : vector<16x256xi32>
    %72 = arith.xori %69, %71 : vector<16x256xi32>
    %c-2073254261_i32_23 = arith.constant -2073254261 : i32
    %73 = vector.broadcast %c-2073254261_i32_23 : i32 to vector<16x256xi32>
    %74 = arith.muli %72, %73 : vector<16x256xi32>
    %c16_i32_24 = arith.constant 16 : i32
    %75 = vector.broadcast %c16_i32_24 : i32 to vector<16x256xi32>
    %76 = arith.shrui %74, %75 : vector<16x256xi32>
    %77 = arith.xori %74, %76 : vector<16x256xi32>
    %c1_i32_25 = arith.constant 1 : i32
    %78 = vector.broadcast %c1_i32_25 : i32 to vector<16x256xi32>
    %79 = arith.shrui %77, %78 : vector<16x256xi32>
    %c1073741824_i32_26 = arith.constant 1073741824 : i32
    %80 = vector.broadcast %c1073741824_i32_26 : i32 to vector<16x256xi32>
    %81 = arith.cmpi sge, %79, %80 : vector<16x256xi32>
    %cst_27 = arith.constant 2.000000e+00 : f32
    %82 = vector.broadcast %cst_27 : f32 to vector<16x256xf32>
    %83 = arith.mulf %52, %82 : vector<16x256xf32>
    %cst_28 = arith.constant 0.000000e+00 : f32
    %84 = vector.broadcast %cst_28 : f32 to vector<16x256xf32>
    %85 = arith.select %81, %83, %84 : vector<16x256xi1>, vector<16x256xf32>
    %c0_29 = arith.constant 0 : index
    %c0_30 = arith.constant 0 : index
    %86 = vector.load %arg7[%c0_29, %c0_30] : memref<16x256xf32, #tpu.memory_space<vmem>>, vector<16x256xf32>
    tpu.vector_store %arg7[%c0_29, %c0_30], %85 {strides = array<i32>} : memref<16x256xf32, #tpu.memory_space<vmem>>, vector<16x256xf32>,
    return
  }
  func.func @transform_0(%arg0: i32, %arg1: memref<1xi32, #tpu.memory_space<smem>>) -> (i32, i32) {
    %c0_i32 = arith.constant 0 : i32
    %c0_i32_0 = arith.constant 0 : i32
    return %arg0, %c0_i32 : i32, i32
  }
  func.func @transform_1(%arg0: i32, %arg1: memref<1xi32, #tpu.memory_space<smem>>) -> (i32, i32) {
    %c0_i32 = arith.constant 0 : i32
    %c0_i32_0 = arith.constant 0 : i32
    %c0_i32_1 = arith.constant 0 : i32
    return %c0_i32, %c0_i32_0 : i32, i32
  }
  func.func @transform_2(%arg0: i32, %arg1: memref<1xi32, #tpu.memory_space<smem>>) -> (i32, i32) {
    %c0_i32 = arith.constant 0 : i32
    %c0_i32_0 = arith.constant 0 : i32
    %c0_i32_1 = arith.constant 0 : i32
    return %c0_i32, %c0_i32_0 : i32, i32
  }
  func.func @transform_3(%arg0: i32, %arg1: memref<1xi32, #tpu.memory_space<smem>>) -> (i32, i32) {
    %c0_i32 = arith.constant 0 : i32
    %c0_i32_0 = arith.constant 0 : i32
    %c0_i32_1 = arith.constant 0 : i32
    return %c0_i32, %c0_i32_0 : i32, i32
  }
  func.func @transform_4(%arg0: i32, %arg1: memref<1xi32, #tpu.memory_space<smem>>) -> (i32, i32) {
    %c0_i32 = arith.constant 0 : i32
    %c0_i32_0 = arith.constant 0 : i32
    %c0_i32_1 = arith.constant 0 : i32
    return %c0_i32, %c0_i32_0 : i32, i32
  }
  func.func @transform_5(%arg0: i32, %arg1: memref<1xi32, #tpu.memory_space<smem>>) -> (i32, i32) {
    %c0_i32 = arith.constant 0 : i32
    %c0_i32_0 = arith.constant 0 : i32
    return %arg0, %c0_i32 : i32, i32
  }
}

</mosaic_0001>

<llo_original>
// kernel: tpu_custom_call.1
$region0: #{tpu_custom_call.1}
  #allocation0 [shape = 'u32[]', space=smem, size = 0x4, offset = 0x4, fixed_abs, tag = 'smem constant byte address 0x4 - core index']
  #allocation1 [shape = 'u32[144,128]{1,0:T(1,128)}', space=vmem, size = 0x12000, scoped, tag = 'internal scratch']
  #allocation2 [shape = 's32[1]{0}', space=sflag, size = 0x4, scoped, tag = 'scoped memory for tpu_custom_call.1']
  #allocation3 [shape = 's32[1]{0:T(128)S(6)}', space=smem, size = 0x200, scoped, tag = 'prefetched SMEM operand 0']
  %s0 = inlined_call_operand.<no memory space> [shape: s32[1], index: 0, kind: input, shape index: {}]
  %s1 = inlined_call_operand.hbm [shape: f32[16,128], index: 1, kind: input, shape index: {}]
  %s2 = inlined_call_operand.hbm [shape: bf16[128,256], index: 2, kind: input, shape index: {}]
  %s3 = inlined_call_operand.vmem [shape: f32[1,256], index: 3, kind: input, shape index: {}]
  %s4 = inlined_call_operand.hbm [shape: bf16[256,256], index: 4, kind: input, shape index: {}]
  %s5 = inlined_call_operand.vmem [shape: f32[1,256], index: 5, kind: input, shape index: {}]
  %s6 = inlined_call_operand.hbm [shape: f32[16,256], index: 6, kind: output, shape index: {}]
  %s7 = sld [smem:[#allocation0]]
  $region42: #{tpu_custom_call.1} parent=0
    _
  %s9 = ssub.s32 1, %s7
  %s10 = scalar_select 0, %s9, %s7
  %11 = sst [smem:[#allocation3]] %s0
  $region1: #{tpu_custom_call.1} parent=0
    #allocation4 [shape = 'u8[8192]{0}', space=vmem, size = 0x2000, scoped, tag = 'input window, operand 1, single buffered']
    #allocation5 [shape = 's32[1]{0}', space=sflag, size = 0x4, scoped, tag = 'scoped memory for tpu_custom_call.1']
    #allocation6 [shape = 's32[1]{0}', space=sflag, size = 0x4, scoped, tag = 'scoped memory for tpu_custom_call.1']
    #allocation7 [shape = 'u8[65536]{0}', space=vmem, size = 0x10000, scoped, tag = 'input window, operand 2, single buffered']
    #allocation8 [shape = 's32[1]{0}', space=sflag, size = 0x4, scoped, tag = 'scoped memory for tpu_custom_call.1']
    #allocation9 [shape = 'u8[131072]{0}', space=vmem, size = 0x20000, scoped, tag = 'input window, operand 4, single buffered']
    #allocation10 [shape = 'u8[16384]{0}', space=vmem, size = 0x4000, scoped, tag = 'output window, operand 0, single buffered']
    %12 = vsyncpa [#allocation5], 0
    %13 = vsyncpa [#allocation8], 0
    %14 = vsyncpa [#allocation6], 0
    // Predicated region
    $region2: #{tpu_custom_call.1} parent=1 // pred_check
      _
    $region3: #{tpu_custom_call.1} parent=1 // pred_check_branch
      %16 = sbr.rel (0) target = $region5
    $region4: #{tpu_custom_call.1} parent=1 // pred_region
      %s18 = ssub.s32 256, 256
      %19 = vsyncadd [#allocation5], %s18
      %s20 = sshll.u32 [#allocation4], 4
      %s21 = int_to_ptr.vmem [resolvable:$true] %s20
      %26 = dma.hbm_to_vmem [thread:$0]  %s1, 256, %s21, [#allocation5], 128, 128, 8
    $region5: #{tpu_custom_call.1} parent=1 // pred_fallthru
      _
    // Predicated region
    $region6: #{tpu_custom_call.1} parent=1 // pred_check
      _
    $region7: #{tpu_custom_call.1} parent=1 // pred_check_branch
      %28 = sbr.rel (0) target = $region9
    $region8: #{tpu_custom_call.1} parent=1 // pred_region
      %s30 = ssub.s32 2048, 2048
      %31 = vsyncadd [#allocation8], %s30
      %s32 = sshll.u32 [#allocation7], 4
      %s33 = int_to_ptr.vmem [resolvable:$true] %s32
      %38 = dma.hbm_to_vmem [thread:$0]  %s2, 2048, %s33, [#allocation8], 128, 128, 8
    $region9: #{tpu_custom_call.1} parent=1 // pred_fallthru
      _
    // Predicated region
    $region10: #{tpu_custom_call.1} parent=1 // pred_check
      _
    $region11: #{tpu_custom_call.1} parent=1 // pred_check_branch
      %40 = sbr.rel (0) target = $region13
    $region12: #{tpu_custom_call.1} parent=1 // pred_region
      _
    $region13: #{tpu_custom_call.1} parent=1 // pred_fallthru
      _
    // Predicated region
    $region14: #{tpu_custom_call.1} parent=1 // pred_check
      _
    $region15: #{tpu_custom_call.1} parent=1 // pred_check_branch
      %42 = sbr.rel (0) target = $region17
    $region16: #{tpu_custom_call.1} parent=1 // pred_region
      %s44 = ssub.s32 4096, 4096
      %45 = vsyncadd [#allocation8], %s44
      %s46 = sshll.u32 [#allocation9], 4
      %s47 = int_to_ptr.vmem [resolvable:$true] %s46
      %52 = dma.hbm_to_vmem [thread:$0]  %s4, 4096, %s47, [#allocation8], 128, 128, 8
    $region17: #{tpu_custom_call.1} parent=1 // pred_fallthru
      _
    // Predicated region
    $region18: #{tpu_custom_call.1} parent=1 // pred_check
      _
    $region19: #{tpu_custom_call.1} parent=1 // pred_check_branch
      %54 = sbr.rel (0) target = $region21
    $region20: #{tpu_custom_call.1} parent=1 // pred_region
      _
    $region21: #{tpu_custom_call.1} parent=1 // pred_fallthru
      _
    // Predicated region
    $region22: #{tpu_custom_call.1} parent=1 // pred_check
      _
    $region23: #{tpu_custom_call.1} parent=1 // pred_check_branch
      %56 = sbr.rel (0) target = $region25
    $region24: #{tpu_custom_call.1} parent=1 // pred_region
      %57 = dma.done [#allocation5], 256
    $region25: #{tpu_custom_call.1} parent=1 // pred_fallthru
      _
    // Predicated region
    $region26: #{tpu_custom_call.1} parent=1 // pred_check
      _
    $region27: #{tpu_custom_call.1} parent=1 // pred_check_branch
      %59 = sbr.rel (0) target = $region29
    $region28: #{tpu_custom_call.1} parent=1 // pred_region
      %60 = dma.done [#allocation8], 2048
    $region29: #{tpu_custom_call.1} parent=1 // pred_fallthru
      _
    // Predicated region
    $region30: #{tpu_custom_call.1} parent=1 // pred_check
      _
    $region31: #{tpu_custom_call.1} parent=1 // pred_check_branch
      %62 = sbr.rel (0) target = $region33
    $region32: #{tpu_custom_call.1} parent=1 // pred_region
      %63 = dma.done [#allocation8], 4096
    $region33: #{tpu_custom_call.1} parent=1 // pred_fallthru
      _
    %s65 = sld [smem:[#allocation3]]
    %s66 = smul.u32 0, 4096
    %v67 = vld [vmem:[#allocation4] sm:$0xff]
    %v68 = vld [vmem:[#allocation4 + $0x8] sm:$0xff]
    %v69 = vpack.c.bf16 %v68, %v67
    %v70 = vld [vmem:[#allocation7] sm:$0xff]
    %v71 = vld [vmem:[#allocation7 + $0x8] sm:$0xff]
    %v72 = vld [vmem:[#allocation7 + $0x10] sm:$0xff]
    %v73 = vld [vmem:[#allocation7 + $0x18] sm:$0xff]
    %v74 = vld [vmem:[#allocation7 + $0x20] sm:$0xff]
    %v75 = vld [vmem:[#allocation7 + $0x28] sm:$0xff]
    %v76 = vld [vmem:[#allocation7 + $0x30] sm:$0xff]
    %v77 = vld [vmem:[#allocation7 + $0x38] sm:$0xff]
    %v78 = vld [vmem:[#allocation7 + $0x40] sm:$0xff]
    %v79 = vld [vmem:[#allocation7 + $0x48] sm:$0xff]
    %v80 = vld [vmem:[#allocation7 + $0x50] sm:$0xff]
    %v81 = vld [vmem:[#allocation7 + $0x58] sm:$0xff]
    %v82 = vld [vmem:[#allocation7 + $0x60] sm:$0xff]
    %v83 = vld [vmem:[#allocation7 + $0x68] sm:$0xff]
    %v84 = vld [vmem:[#allocation7 + $0x70] sm:$0xff]
    %v85 = vld [vmem:[#allocation7 + $0x78] sm:$0xff]
    %v86 = vld [vmem:[%s3] sm:$0x3]
    %v88 = vlaneseq
    %v89 = vshrl.u32 %v88, 7
    %v90 = vsub.s32 0, %v89
    %v91 = vrot.slane %v86, %v90
    %v92 = vlaneseq
    %v93 = vshrl.u32 %v92, 7
    %v94 = vsub.s32 1, %v93
    %v95 = vrot.slane %v86, %v94
    %v114 = vunpack.c.l.b16 %v70
    %v115 = vunpack.c.h.b16 %v70
    %v116 = vunpack.c.l.b16 %v71
    %v117 = vunpack.c.h.b16 %v71
    %v118 = vunpack.c.l.b16 %v72
    %v119 = vunpack.c.h.b16 %v72
    %v120 = vunpack.c.l.b16 %v73
    %v121 = vunpack.c.h.b16 %v73
    %v122 = vunpack.c.l.b16 %v74
    %v123 = vunpack.c.h.b16 %v74
    %v124 = vunpack.c.l.b16 %v75
    %v125 = vunpack.c.h.b16 %v75
    %v126 = vunpack.c.l.b16 %v76
    %v127 = vunpack.c.h.b16 %v76
    %v128 = vunpack.c.l.b16 %v77
    %v129 = vunpack.c.h.b16 %v77
    %v130 = vunpack.c.l.b16 %v78
    %v131 = vunpack.c.h.b16 %v78
    %v132 = vunpack.c.l.b16 %v79
    %v133 = vunpack.c.h.b16 %v79
    %v134 = vunpack.c.l.b16 %v80
    %v135 = vunpack.c.h.b16 %v80
    %v136 = vunpack.c.l.b16 %v81
    %v137 = vunpack.c.h.b16 %v81
    %v138 = vunpack.c.l.b16 %v82
    %v139 = vunpack.c.h.b16 %v82
    %v140 = vunpack.c.l.b16 %v83
    %v141 = vunpack.c.h.b16 %v83
    %v142 = vunpack.c.l.b16 %v84
    %v143 = vunpack.c.h.b16 %v84
    %v144 = vunpack.c.l.b16 %v85
    %v145 = vunpack.c.h.b16 %v85
    %v146 = vpack.c.b16 %v116, %v114
    %v147 = vpack.c.b16 %v117, %v115
    %v148 = vpack.c.b16 %v120, %v118
    %v149 = vpack.c.b16 %v121, %v119
    %v150 = vpack.c.b16 %v124, %v122
    %v151 = vpack.c.b16 %v125, %v123
    %v152 = vpack.c.b16 %v128, %v126
    %v153 = vpack.c.b16 %v129, %v127
    %v154 = vpack.c.b16 %v132, %v130
    %v155 = vpack.c.b16 %v133, %v131
    %v156 = vpack.c.b16 %v136, %v134
    %v157 = vpack.c.b16 %v137, %v135
    %v158 = vpack.c.b16 %v140, %v138
    %v159 = vpack.c.b16 %v141, %v139
    %v160 = vpack.c.b16 %v144, %v142
    %v161 = vpack.c.b16 %v145, %v143
    %178 = vmatprep.subr.bf16.mxu0 %v147
    %179 = vmatpush1.bf16.msra.mxu0 %v146
    %180 = vmatprep.subr.bf16.mxu0 %v149
    %181 = vmatpush1.bf16.msra.mxu0 %v148
    %182 = vmatprep.subr.bf16.mxu0 %v151
    %183 = vmatpush1.bf16.msra.mxu0 %v150
    %184 = vmatprep.subr.bf16.mxu0 %v153
    %185 = vmatpush1.bf16.msra.mxu0 %v152
    %186 = vmatprep.subr.bf16.mxu0 %v155
    %187 = vmatpush1.bf16.msra.mxu0 %v154
    %188 = vmatprep.subr.bf16.mxu0 %v157
    %189 = vmatpush1.bf16.msra.mxu0 %v156
    %190 = vmatprep.subr.bf16.mxu0 %v159
    %191 = vmatpush1.bf16.msra.mxu0 %v158
    %192 = vmatprep.subr.bf16.mxu0 %v161
    %193 = vmatpush1.bf16.msra.mxu0 %v160
    %194 = vmatprep.subr.bf16.mxu0 0
    %195 = vmatpush1.bf16.msra.mxu0 0
    %196 = vmatprep.subr.bf16.mxu0 0
    %197 = vmatpush1.bf16.msra.mxu0 0
    %198 = vmatprep.subr.bf16.mxu0 0
    %199 = vmatpush1.bf16.msra.mxu0 0
    %200 = vmatprep.subr.bf16.mxu0 0
    %201 = vmatpush1.bf16.msra.mxu0 0
    %202 = vmatprep.subr.bf16.mxu0 0
    %203 = vmatpush1.bf16.msra.mxu0 0
    %204 = vmatprep.subr.bf16.mxu0 0
    %205 = vmatpush1.bf16.msra.mxu0 0
    %206 = vmatprep.subr.bf16.mxu0 0
    %207 = vmatpush1.bf16.msra.mxu0 0
    %208 = vmatprep.subr.bf16.mxu0 0
    %209 = vmatpush1.bf16.msra.mxu0 0
    %210 = vmatprep.mubr.bf16.mxu0 0
    %211 = vmatmul.mubr.bf16.gmra.mrb[0].mxu0 %v69
    %v212 = vpop.f32.mrb[0].mxu0
    %v213 = vadd.f32 %v91, %v212
    %v214 = vpop.f32.mrb[0].mxu0
    %v215 = vadd.f32 %v95, %v214
    %v216 = vpop.f32.mrb[0].mxu0
    %v217 = vadd.f32 %v91, %v216
    %v218 = vpop.f32.mrb[0].mxu0
    %v219 = vadd.f32 %v95, %v218
    %220 = vdwg.mxu0
    %v221 = vmax.f32 %v213, 0.0
    %v222 = vmax.f32 %v215, 0.0
    %v223 = vmax.f32 %v217, 0.0
    %v224 = vmax.f32 %v219, 0.0
    %v225 = vlaneseq
    %v226 = vshrl.u32 %v225, 7
    %v227 = vadd.s32 %v226, 8
    %v228 = vlaneseq
    %v229 = vand.u32 %v228, 127
    %v230 = vadd.s32 %v229, 128
    %v231 = vmul.u32 %v226, 256
    %v232 = vmul.u32 %v227, 256
    %v233 = vstv %s66
    %v234 = vadd.s32 %v233, %v231
    %v235 = vadd.s32 %v233, %v232
    %v236 = vadd.s32 %v234, %v229
    %v237 = vadd.s32 %v234, %v230
    %v238 = vadd.s32 %v235, %v229
    %v239 = vadd.s32 %v235, %v230
    %s240 = smul.u32 %s65, 2654435769
    %v241 = vstv %s240
    %v242 = vadd.s32 %v236, %v241
    %v243 = vadd.s32 %v237, %v241
    %v244 = vadd.s32 %v238, %v241
    %v245 = vadd.s32 %v239, %v241
    %v246 = vadd.s32 %v242, 608135816
    %v247 = vadd.s32 %v243, 608135816
    %v248 = vadd.s32 %v244, 608135816
    %v249 = vadd.s32 %v245, 608135816
    %v250 = vshrl.u32 %v246, 16
    %v251 = vshrl.u32 %v247, 16
    %v252 = vshrl.u32 %v248, 16
    %v253 = vshrl.u32 %v249, 16
    %v254 = vxor.u32 %v246, %v250
    %v255 = vxor.u32 %v247, %v251
    %v256 = vxor.u32 %v248, %v252
    %v257 = vxor.u32 %v249, %v253
    %v258 = vmul.u32 %v254, 2146121005
    %v259 = vmul.u32 %v255, 2146121005
    %v260 = vmul.u32 %v256, 2146121005
    %v261 = vmul.u32 %v257, 2146121005
    %v262 = vshrl.u32 %v258, 15
    %v263 = vshrl.u32 %v259, 15
    %v264 = vshrl.u32 %v260, 15
    %v265 = vshrl.u32 %v261, 15
    %v266 = vxor.u32 %v258, %v262
    %v267 = vxor.u32 %v259, %v263
    %v268 = vxor.u32 %v260, %v264
    %v269 = vxor.u32 %v261, %v265
    %v270 = vmul.u32 %v266, 2221713035
    %v271 = vmul.u32 %v267, 2221713035
    %v272 = vmul.u32 %v268, 2221713035
    %v273 = vmul.u32 %v269, 2221713035
    %v274 = vshrl.u32 %v270, 16
    %v275 = vshrl.u32 %v271, 16
    %v276 = vshrl.u32 %v272, 16
    %v277 = vshrl.u32 %v273, 16
    %v278 = vxor.u32 %v270, %v274
    %v279 = vxor.u32 %v271, %v275
    %v280 = vxor.u32 %v272, %v276
    %v281 = vxor.u32 %v273, %v277
    %v282 = vshrl.u32 %v278, 1
    %v283 = vshrl.u32 %v279, 1
    %v284 = vshrl.u32 %v280, 1
    %v285 = vshrl.u32 %v281, 1
    %vm286 = vcmp.ge.s32.totalorder %v282, 1073741824
    %vm287 = vcmp.ge.s32.totalorder %v283, 1073741824
    %vm288 = vcmp.ge.s32.totalorder %v284, 1073741824
    %vm289 = vcmp.ge.s32.totalorder %v285, 1073741824
    %v290 = vmul.f32 %v221, 2.0
    %v291 = vmul.f32 %v222, 2.0
    %v292 = vmul.f32 %v223, 2.0
    %v293 = vmul.f32 %v224, 2.0
    %v294 = vsel %vm286, %v290, 0.0
    %v295 = vsel %vm287, %v291, 0.0
    %v296 = vsel %vm288, %v292, 0.0
    %v297 = vsel %vm289, %v293, 0.0
    %v298 = vpack.c.bf16 %v296, %v294
    %v299 = vpack.c.bf16 %v297, %v295
    %v300 = vld [vmem:[#allocation9] sm:$0xff]
    %v301 = vld [vmem:[#allocation9 + $0x8] sm:$0xff]
    %v302 = vld [vmem:[#allocation9 + $0x10] sm:$0xff]
    %v303 = vld [vmem:[#allocation9 + $0x18] sm:$0xff]
    %v304 = vld [vmem:[#allocation9 + $0x20] sm:$0xff]
    %v305 = vld [vmem:[#allocation9 + $0x28] sm:$0xff]
    %v306 = vld [vmem:[#allocation9 + $0x30] sm:$0xff]
    %v307 = vld [vmem:[#allocation9 + $0x38] sm:$0xff]
    %v308 = vld [vmem:[#allocation9 + $0x40] sm:$0xff]
    %v309 = vld [vmem:[#allocation9 + $0x48] sm:$0xff]
    %v310 = vld [vmem:[#allocation9 + $0x50] sm:$0xff]
    %v311 = vld [vmem:[#allocation9 + $0x58] sm:$0xff]
    %v312 = vld [vmem:[#allocation9 + $0x60] sm:$0xff]
    %v313 = vld [vmem:[#allocation9 + $0x68] sm:$0xff]
    %v314 = vld [vmem:[#allocation9 + $0x70] sm:$0xff]
    %v315 = vld [vmem:[#allocation9 + $0x78] sm:$0xff]
    %v316 = vld [vmem:[#allocation9 + $0x80] sm:$0xff]
    %v317 = vld [vmem:[#allocation9 + $0x88] sm:$0xff]
    %v318 = vld [vmem:[#allocation9 + $0x90] sm:$0xff]
    %v319 = vld [vmem:[#allocation9 + $0x98] sm:$0xff]
    %v320 = vld [vmem:[#allocation9 + $0xa0] sm:$0xff]
    %v321 = vld [vmem:[#allocation9 + $0xa8] sm:$0xff]
    %v322 = vld [vmem:[#allocation9 + $0xb0] sm:$0xff]
    %v323 = vld [vmem:[#allocation9 + $0xb8] sm:$0xff]
    %v324 = vld [vmem:[#allocation9 + $0xc0] sm:$0xff]
    %v325 = vld [vmem:[#allocation9 + $0xc8] sm:$0xff]
    %v326 = vld [vmem:[#allocation9 + $0xd0] sm:$0xff]
    %v327 = vld [vmem:[#allocation9 + $0xd8] sm:$0xff]
    %v328 = vld [vmem:[#allocation9 + $0xe0] sm:$0xff]
    %v329 = vld [vmem:[#allocation9 + $0xe8] sm:$0xff]
    %v330 = vld [vmem:[#allocation9 + $0xf0] sm:$0xff]
    %v331 = vld [vmem:[#allocation9 + $0xf8] sm:$0xff]
    %v332 = vld [vmem:[%s5] sm:$0x3]
    %v334 = vlaneseq
    %v335 = vshrl.u32 %v334, 7
    %v336 = vsub.s32 0, %v335
    %v337 = vrot.slane %v332, %v336
    %v338 = vlaneseq
    %v339 = vshrl.u32 %v338, 7
    %v340 = vsub.s32 1, %v339
    %v341 = vrot.slane %v332, %v340
    %v376 = vunpack.c.l.b16 %v300
    %v377 = vunpack.c.h.b16 %v300
    %v378 = vunpack.c.l.b16 %v301
    %v379 = vunpack.c.h.b16 %v301
    %v380 = vunpack.c.l.b16 %v302
    %v381 = vunpack.c.h.b16 %v302
    %v382 = vunpack.c.l.b16 %v303
    %v383 = vunpack.c.h.b16 %v303
    %v384 = vunpack.c.l.b16 %v304
    %v385 = vunpack.c.h.b16 %v304
    %v386 = vunpack.c.l.b16 %v305
    %v387 = vunpack.c.h.b16 %v305
    %v388 = vunpack.c.l.b16 %v306
    %v389 = vunpack.c.h.b16 %v306
    %v390 = vunpack.c.l.b16 %v307
    %v391 = vunpack.c.h.b16 %v307
    %v392 = vunpack.c.l.b16 %v308
    %v393 = vunpack.c.h.b16 %v308
    %v394 = vunpack.c.l.b16 %v309
    %v395 = vunpack.c.h.b16 %v309
    %v396 = vunpack.c.l.b16 %v310
    %v397 = vunpack.c.h.b16 %v310
    %v398 = vunpack.c.l.b16 %v311
    %v399 = vunpack.c.h.b16 %v311
    %v400 = vunpack.c.l.b16 %v312
    %v401 = vunpack.c.h.b16 %v312
    %v402 = vunpack.c.l.b16 %v313
    %v403 = vunpack.c.h.b16 %v313
    %v404 = vunpack.c.l.b16 %v314
    %v405 = vunpack.c.h.b16 %v314
    %v406 = vunpack.c.l.b16 %v315
    %v407 = vunpack.c.h.b16 %v315
    %v408 = vunpack.c.l.b16 %v316
    %v409 = vunpack.c.h.b16 %v316
    %v410 = vunpack.c.l.b16 %v317
    %v411 = vunpack.c.h.b16 %v317
    %v412 = vunpack.c.l.b16 %v318
    %v413 = vunpack.c.h.b16 %v318
    %v414 = vunpack.c.l.b16 %v319
    %v415 = vunpack.c.h.b16 %v319
    %v416 = vunpack.c.l.b16 %v320
    %v417 = vunpack.c.h.b16 %v320
    %v418 = vunpack.c.l.b16 %v321
    %v419 = vunpack.c.h.b16 %v321
    %v420 = vunpack.c.l.b16 %v322
    %v421 = vunpack.c.h.b16 %v322
    %v422 = vunpack.c.l.b16 %v323
    %v423 = vunpack.c.h.b16 %v323
    %v424 = vunpack.c.l.b16 %v324
    %v425 = vunpack.c.h.b16 %v324
    %v426 = vunpack.c.l.b16 %v325
    %v427 = vunpack.c.h.b16 %v325
    %v428 = vunpack.c.l.b16 %v326
    %v429 = vunpack.c.h.b16 %v326
    %v430 = vunpack.c.l.b16 %v327
    %v431 = vunpack.c.h.b16 %v327
    %v432 = vunpack.c.l.b16 %v328
    %v433 = vunpack.c.h.b16 %v328
    %v434 = vunpack.c.l.b16 %v329
    %v435 = vunpack.c.h.b16 %v329
    %v436 = vunpack.c.l.b16 %v330
    %v437 = vunpack.c.h.b16 %v330
    %v438 = vunpack.c.l.b16 %v331
    %v439 = vunpack.c.h.b16 %v331
    %v440 = vpack.c.b16 %v378, %v376
    %v441 = vpack.c.b16 %v379, %v377
    %v442 = vpack.c.b16 %v382, %v380
    %v443 = vpack.c.b16 %v383, %v381
    %v444 = vpack.c.b16 %v386, %v384
    %v445 = vpack.c.b16 %v387, %v385
    %v446 = vpack.c.b16 %v390, %v388
    %v447 = vpack.c.b16 %v391, %v389
    %v448 = vpack.c.b16 %v394, %v392
    %v449 = vpack.c.b16 %v395, %v393
    %v450 = vpack.c.b16 %v398, %v396
    %v451 = vpack.c.b16 %v399, %v397
    %v452 = vpack.c.b16 %v402, %v400
    %v453 = vpack.c.b16 %v403, %v401
    %v454 = vpack.c.b16 %v406, %v404
    %v455 = vpack.c.b16 %v407, %v405
    %v456 = vpack.c.b16 %v410, %v408
    %v457 = vpack.c.b16 %v411, %v409
    %v458 = vpack.c.b16 %v414, %v412
    %v459 = vpack.c.b16 %v415, %v413
    %v460 = vpack.c.b16 %v418, %v416
    %v461 = vpack.c.b16 %v419, %v417
    %v462 = vpack.c.b16 %v422, %v420
    %v463 = vpack.c.b16 %v423, %v421
    %v464 = vpack.c.b16 %v426, %v424
    %v465 = vpack.c.b16 %v427, %v425
    %v466 = vpack.c.b16 %v430, %v428
    %v467 = vpack.c.b16 %v431, %v429
    %v468 = vpack.c.b16 %v434, %v432
    %v469 = vpack.c.b16 %v435, %v433
    %v470 = vpack.c.b16 %v438, %v436
    %v471 = vpack.c.b16 %v439, %v437
    %504 = vmatprep.subr.bf16.mxu0 %v441
    %505 = vmatpush1.bf16.msra.mxu0 %v440
    %506 = vmatprep.subr.bf16.mxu0 %v443
    %507 = vmatpush1.bf16.msra.mxu0 %v442
    %508 = vmatprep.subr.bf16.mxu0 %v445
    %509 = vmatpush1.bf16.msra.mxu0 %v444
    %510 = vmatprep.subr.bf16.mxu0 %v447
    %511 = vmatpush1.bf16.msra.mxu0 %v446
    %512 = vmatprep.subr.bf16.mxu0 %v449
    %513 = vmatpush1.bf16.msra.mxu0 %v448
    %514 = vmatprep.subr.bf16.mxu0 %v451
    %515 = vmatpush1.bf16.msra.mxu0 %v450
    %516 = vmatprep.subr.bf16.mxu0 %v453
    %517 = vmatpush1.bf16.msra.mxu0 %v452
    %518 = vmatprep.subr.bf16.mxu0 %v455
    %519 = vmatpush1.bf16.msra.mxu0 %v454
    %520 = vmatprep.subr.bf16.mxu0 %v457
    %521 = vmatpush1.bf16.msra.mxu0 %v456
    %522 = vmatprep.subr.bf16.mxu0 %v459
    %523 = vmatpush1.bf16.msra.mxu0 %v458
    %524 = vmatprep.subr.bf16.mxu0 %v461
    %525 = vmatpush1.bf16.msra.mxu0 %v460
    %526 = vmatprep.subr.bf16.mxu0 %v463
    %527 = vmatpush1.bf16.msra.mxu0 %v462
    %528 = vmatprep.subr.bf16.mxu0 %v465
    %529 = vmatpush1.bf16.msra.mxu0 %v464
    %530 = vmatprep.subr.bf16.mxu0 %v467
    %531 = vmatpush1.bf16.msra.mxu0 %v466
    %532 = vmatprep.subr.bf16.mxu0 %v469
    %533 = vmatpush1.bf16.msra.mxu0 %v468
    %534 = vmatprep.subr.bf16.mxu0 %v471
    %535 = vmatpush1.bf16.msra.mxu0 %v470
    %536 = vmatprep.mubr.bf16.mxu0 %v299
    %537 = vmatmul.mubr.bf16.gmra.mrb[0].mxu0 %v298
    %v538 = vpop.f32.mrb[0].mxu0
    %v539 = vadd.f32 %v337, %v538
    %v540 = vpop.f32.mrb[0].mxu0
    %v541 = vadd.f32 %v341, %v540
    %v542 = vpop.f32.mrb[0].mxu0
    %v543 = vadd.f32 %v337, %v542
    %v544 = vpop.f32.mrb[0].mxu0
    %v545 = vadd.f32 %v341, %v544
    %546 = vdwg.mxu0
    %v547 = vmax.f32 %v539, 0.0
    %v548 = vmax.f32 %v541, 0.0
    %v549 = vmax.f32 %v543, 0.0
    %v550 = vmax.f32 %v545, 0.0
    %v551 = vadd.s32 %v242, 1160258022
    %v552 = vadd.s32 %v243, 1160258022
    %v553 = vadd.s32 %v244, 1160258022
    %v554 = vadd.s32 %v245, 1160258022
    %v555 = vshrl.u32 %v551, 16
    %v556 = vshrl.u32 %v552, 16
    %v557 = vshrl.u32 %v553, 16
    %v558 = vshrl.u32 %v554, 16
    %v559 = vxor.u32 %v551, %v555
    %v560 = vxor.u32 %v552, %v556
    %v561 = vxor.u32 %v553, %v557
    %v562 = vxor.u32 %v554, %v558
    %v563 = vmul.u32 %v559, 2146121005
    %v564 = vmul.u32 %v560, 2146121005
    %v565 = vmul.u32 %v561, 2146121005
    %v566 = vmul.u32 %v562, 2146121005
    %v567 = vshrl.u32 %v563, 15
    %v568 = vshrl.u32 %v564, 15
    %v569 = vshrl.u32 %v565, 15
    %v570 = vshrl.u32 %v566, 15
    %v571 = vxor.u32 %v563, %v567
    %v572 = vxor.u32 %v564, %v568
    %v573 = vxor.u32 %v565, %v569
    %v574 = vxor.u32 %v566, %v570
    %v575 = vmul.u32 %v571, 2221713035
    %v576 = vmul.u32 %v572, 2221713035
    %v577 = vmul.u32 %v573, 2221713035
    %v578 = vmul.u32 %v574, 2221713035
    %v579 = vshrl.u32 %v575, 16
    %v580 = vshrl.u32 %v576, 16
    %v581 = vshrl.u32 %v577, 16
    %v582 = vshrl.u32 %v578, 16
    %v583 = vxor.u32 %v575, %v579
    %v584 = vxor.u32 %v576, %v580
    %v585 = vxor.u32 %v577, %v581
    %v586 = vxor.u32 %v578, %v582
    %v587 = vshrl.u32 %v583, 1
    %v588 = vshrl.u32 %v584, 1
    %v589 = vshrl.u32 %v585, 1
    %v590 = vshrl.u32 %v586, 1
    %vm591 = vcmp.ge.s32.totalorder %v587, 1073741824
    %vm592 = vcmp.ge.s32.totalorder %v588, 1073741824
    %vm593 = vcmp.ge.s32.totalorder %v589, 1073741824
    %vm594 = vcmp.ge.s32.totalorder %v590, 1073741824
    %v595 = vmul.f32 %v547, 2.0
    %v596 = vmul.f32 %v548, 2.0
    %v597 = vmul.f32 %v549, 2.0
    %v598 = vmul.f32 %v550, 2.0
    %v599 = vsel %vm591, %v595, 0.0
    %v600 = vsel %vm592, %v596, 0.0
    %v601 = vsel %vm593, %v597, 0.0
    %v602 = vsel %vm594, %v598, 0.0
    %603 = vst [vmem:[#allocation10] sm:$0xff] %v599
    %604 = vst [vmem:[#allocation10 + $0x8] sm:$0xff] %v600
    %605 = vst [vmem:[#allocation10 + $0x10] sm:$0xff] %v601
    %606 = vst [vmem:[#allocation10 + $0x18] sm:$0xff] %v602
    // Predicated region
    $region34: #{tpu_custom_call.1} parent=1 // pred_check
      _
    $region35: #{tpu_custom_call.1} parent=1 // pred_check_branch
      %608 = sbr.rel (0) target = $region37
    $region36: #{tpu_custom_call.1} parent=1 // pred_region
      %s610 = ssub.s32 512, 512
      %611 = vsyncadd [#allocation6], %s610
      %s612 = sshll.u32 [#allocation10], 4
      %s613 = int_to_ptr.vmem [resolvable:$true] %s612
      %618 = dma.vmem_to_hbm [thread:$0]  %s613, 512, %s6, [#allocation6], 256, 256, 16
    $region37: #{tpu_custom_call.1} parent=1 // pred_fallthru
      _
    // Predicated region
    $region38: #{tpu_custom_call.1} parent=1 // pred_check
      _
    $region39: #{tpu_custom_call.1} parent=1 // pred_check_branch
      %620 = sbr.rel (0) target = $region41
    $region40: #{tpu_custom_call.1} parent=1 // pred_region
      %621 = dma.done [#allocation6], 512
    $region41: #{tpu_custom_call.1} parent=1 // pred_fallthru
      _
    %622 = vsyncpa [#allocation5], 1
    %623 = vsyncpa [#allocation8], 1
    %624 = vsyncpa [#allocation6], 1

</llo_original>
